<compile_context>
chip_gen: v7x
topology: tpu7x:2x2x1
jax: 0.10.0
libtpu: 0.0.40
codegen_flags: <defaults>
</compile_context>

<pallas_src>
import functools

import jax
import jax.numpy as jnp
from jax.experimental import pallas as pl
from jax.experimental.pallas import tpu as pltpu


def _round_up(a, m):
    return ((a + m - 1) // m) * m


def _mlp_kernel(xt_ref, w1_ref, b1_ref, w2_ref, b2_ref, w3_ref, b3_ref, o_ref):
    # xt_ref: (in_size, block_b)  -- batch on the 128-lane axis (lane-dense)
    # w*:     (out_features, in_features) (native PyTorch layout)
    # b*:     (out_features, 1)
    # o_ref:  (out_size, block_b) -- lane-dense store
    h1 = jnp.dot(w1_ref[...], xt_ref[...],
                 preferred_element_type=jnp.float32) + b1_ref[...]
    h1 = jnp.maximum(h1, 0.0)                                   # (hidden, block_b)

    h2 = jnp.dot(w2_ref[...], h1.astype(w2_ref.dtype),
                 preferred_element_type=jnp.float32) + b2_ref[...]
    h2 = jnp.maximum(h2, 0.0)                                   # (hidden, block_b)

    out = jnp.dot(w3_ref[...], h2.astype(w3_ref.dtype),
                  preferred_element_type=jnp.float32) + b3_ref[...]
    o_ref[...] = out.astype(o_ref.dtype)                        # (out_size, block_b)


def _invariant_spec(shape):
    # Grid-invariant operand: same block every step -> single-buffer it.
    return pl.BlockSpec(shape, lambda i: (0, 0), pipeline_mode=pl.Buffered(1))


@functools.partial(jax.jit, static_argnames=("block_b", "compute_dtype"))
def meta_value_network_forward(x, w1, b1, w2, b2, w3, b3, *,
                               block_b=None, compute_dtype=None):
    """x: (B, input_size); w*: (out, in) (PyTorch layout); b*: (out, 1).

    Returns (B, output_size), matching MetaValueNetwork.forward.
    compute_dtype (e.g. jnp.bfloat16) optionally casts x/weights for the
    matmuls while accumulating in f32 (relaxes numerics vs the f32 reference).
    """
    B, in_size = x.shape
    hidden = w1.shape[0]
    out_size = w3.shape[0]
    out_dtype = x.dtype

    # Batch-tile policy:
    #  * pad batch to a multiple of 128 (lane-dense output / activations)
    #  * B <= 256: single grid step (overhead-bound regime)
    #  * B  > 256: >= 2 parallel grid steps (v7x dual-TC), block_b capped at 512
    if block_b is None:
        if B <= 256:
            block_b = _round_up(B, 128)
        else:
            block_b = min(512, _round_up((B + 1) // 2, 128))
    else:
        block_b = _round_up(max(block_b, 128), 128)

    b_pad = _round_up(B, block_b)
    grid = (b_pad // block_b,)

    # Lane-dense x: (in_size, B) -- a 4-row transpose in the wrapper is cheap
    # layout plumbing and removes the 4->128 lane padding of (B, 4) blocks.
    x_t = x.T
    if b_pad != B:
        x_t = jnp.pad(x_t, ((0, 0), (0, b_pad - B)))

    if compute_dtype is not None:
        x_t = x_t.astype(compute_dtype)
        w1 = w1.astype(compute_dtype)
        w2 = w2.astype(compute_dtype)
        w3 = w3.astype(compute_dtype)

    in_specs = [
        pl.BlockSpec((in_size, block_b), lambda i: (0, i)),   # x^T (batch-tiled)
        _invariant_spec((hidden, in_size)),                   # w1
        _invariant_spec((hidden, 1)),                         # b1
        _invariant_spec((hidden, hidden)),                    # w2
        _invariant_spec((hidden, 1)),                         # b2
        _invariant_spec((out_size, hidden)),                  # w3
        _invariant_spec((out_size, 1)),                       # b3
    ]
    out_spec = pl.BlockSpec((out_size, block_b), lambda i: (0, i))

    flops = 2 * b_pad * (in_size * hidden + hidden * hidden + hidden * out_size)
    bytes_accessed = (
        x_t.dtype.itemsize * b_pad * in_size
        + w1.dtype.itemsize * (hidden * in_size + hidden * hidden + out_size * hidden)
        + b1.dtype.itemsize * (2 * hidden + out_size)
        + out_dtype.itemsize * out_size * b_pad
    )

    out_t = pl.pallas_call(
        _mlp_kernel,
        out_shape=jax.ShapeDtypeStruct((out_size, b_pad), out_dtype),
        grid_spec=pl.GridSpec(grid=grid, in_specs=in_specs, out_specs=out_spec),
        compiler_params=pltpu.CompilerParams(
            dimension_semantics=("parallel",),
        ),
        cost_estimate=pl.CostEstimate(
            flops=flops, transcendentals=0, bytes_accessed=bytes_accessed
        ),
    )(x_t, w1, b1, w2, b2, w3, b3)

    # (out_size, b_pad) -> (B, out_size); padded columns are sliced off.
    return out_t[:, :B].T


def init_params(key, input_size, hidden_size, output_size):
    """PyTorch nn.Linear default init (U[-1/sqrt(fan_in), +]); native (out, in) layout."""
    keys = jax.random.split(key, 6)

    def linear(kw, kb, fan_in, fan_out):
        bound = 1.0 / jnp.sqrt(jnp.float32(fan_in))
        w = jax.random.uniform(kw, (fan_out, fan_in), jnp.float32, -bound, bound)
        b = jax.random.uniform(kb, (fan_out, 1), jnp.float32, -bound, bound)
        return w, b

    w1, b1 = linear(keys[0], keys[1], input_size, hidden_size)
    w2, b2 = linear(keys[2], keys[3], hidden_size, hidden_size)
    w3, b3 = linear(keys[4], keys[5], hidden_size, output_size)
    return w1, b1, w2, b2, w3, b3


def reference_forward(x, w1, b1, w2, b2, w3, b3):
    h1 = jnp.maximum(x @ w1.T + b1.T, 0.0)
    h2 = jnp.maximum(h1 @ w2.T + b2.T, 0.0)
    return h2 @ w3.T + b3.T


if __name__ == "__main__":
    # Shapes consistent with the sin-regression usage of MetaValueNetwork.
    input_size = 4
    hidden_size = 32
    output_size = 1

    key = jax.random.PRNGKey(0)
    kx_small, kx_big, kp = jax.random.split(key, 3)
    params = init_params(kp, input_size, hidden_size, output_size)

    # Small batch: single grid step, batch padded to 128 lanes.
    x_small = jax.random.normal(kx_small, (64, input_size), dtype=jnp.float32)
    out_small = jax.block_until_ready(meta_value_network_forward(x_small, *params))
    ref_small = reference_forward(x_small, *params)
    assert out_small.shape == (64, output_size), out_small.shape
    assert jnp.allclose(out_small, ref_small, atol=1e-5, rtol=1e-5), "small-batch mismatch"

    # Larger batch: tiled path (2 parallel grid steps -> both TensorCores on v7x),
    # exercises batch padding + single-buffered weights across steps.
    x_big = jax.random.normal(kx_big, (640, input_size), dtype=jnp.float32)
    out_big = jax.block_until_ready(meta_value_network_forward(x_big, *params))
    ref_big = reference_forward(x_big, *params)
    assert out_big.shape == (640, output_size), out_big.shape
    assert jnp.allclose(out_big, ref_big, atol=1e-5, rtol=1e-5), "tiled-path mismatch"

    print("KERNEL_OK")
</pallas_src>

<mosaic_0001>
module attributes {stable_mosaic.version = 11 : i64} {
  func.func @_mlp_kernel(%arg0: i32, %arg1: memref<4x128xf32, #tpu.memory_space<vmem>>, %arg2: memref<32x4xf32, #tpu.memory_space<vmem>>, %arg3: memref<32x1xf32, #tpu.memory_space<vmem>>, %arg4: memref<32x32xf32, #tpu.memory_space<vmem>>, %arg5: memref<32x1xf32, #tpu.memory_space<vmem>>, %arg6: memref<1x32xf32, #tpu.memory_space<vmem>>, %arg7: memref<1x1xf32, #tpu.memory_space<vmem>>, %arg8: memref<1x128xf32, #tpu.memory_space<vmem>>) attributes {dimension_semantics = [#tpu.dimension_semantics<parallel>], iteration_bounds = array<i64: 1>, scalar_prefetch = 0 : i64, scratch_operands = 0 : i64, tpu.core_type = #tpu.core_type<tc>, window_params = [{transform_indices = @transform_0, window_bounds = array<i64: 4, 128>}, {pipeline_mode = #tpu.pipeline_mode<synchronous>, transform_indices = @transform_1, window_bounds = array<i64: 32, 4>}, {pipeline_mode = #tpu.pipeline_mode<synchronous>, transform_indices = @transform_2, window_bounds = array<i64: 32, 1>}, {pipeline_mode = #tpu.pipeline_mode<synchronous>, transform_indices = @transform_3, window_bounds = array<i64: 32, 32>}, {pipeline_mode = #tpu.pipeline_mode<synchronous>, transform_indices = @transform_4, window_bounds = array<i64: 32, 1>}, {pipeline_mode = #tpu.pipeline_mode<synchronous>, transform_indices = @transform_5, window_bounds = array<i64: 1, 32>}, {pipeline_mode = #tpu.pipeline_mode<synchronous>, transform_indices = @transform_6, window_bounds = array<i64: 1, 1>}, {transform_indices = @transform_7, window_bounds = array<i64: 1, 128>}]} {
    %c0 = arith.constant 0 : index
    %c0_0 = arith.constant 0 : index
    %0 = vector.load %arg2[%c0, %c0_0] : memref<32x4xf32, #tpu.memory_space<vmem>>, vector<32x4xf32>
    %c0_1 = arith.constant 0 : index
    %c0_2 = arith.constant 0 : index
    %1 = vector.load %arg1[%c0_1, %c0_2] : memref<4x128xf32, #tpu.memory_space<vmem>>, vector<4x128xf32>
    %cst = arith.constant dense<0.000000e+00> : vector<32x128xf32>
    %2 = tpu.matmul %0, %1, %cst {dimension_numbers = #tpu.dot_dimension_numbers<[1], [0], [0], [1], [0, 0, 1, 1], [], []>} : vector<32x4xf32>, vector<4x128xf32>, vector<32x128xf32> -> vector<32x128xf32>
    %c0_3 = arith.constant 0 : index
    %c0_4 = arith.constant 0 : index
    %3 = vector.load %arg3[%c0_3, %c0_4] : memref<32x1xf32, #tpu.memory_space<vmem>>, vector<32x1xf32>
    %4 = vector.broadcast %3 : vector<32x1xf32> to vector<32x128xf32>
    %5 = arith.addf %2, %4 : vector<32x128xf32>
    %cst_5 = arith.constant 0.000000e+00 : f32
    %6 = vector.broadcast %cst_5 : f32 to vector<32x128xf32>
    %7 = arith.maximumf %5, %6 : vector<32x128xf32>
    %c0_6 = arith.constant 0 : index
    %c0_7 = arith.constant 0 : index
    %8 = vector.load %arg4[%c0_6, %c0_7] : memref<32x32xf32, #tpu.memory_space<vmem>>, vector<32x32xf32>
    %cst_8 = arith.constant dense<0.000000e+00> : vector<32x128xf32>
    %9 = tpu.matmul %8, %7, %cst_8 {dimension_numbers = #tpu.dot_dimension_numbers<[1], [0], [0], [1], [0, 0, 1, 1], [], []>} : vector<32x32xf32>, vector<32x128xf32>, vector<32x128xf32> -> vector<32x128xf32>
    %c0_9 = arith.constant 0 : index
    %c0_10 = arith.constant 0 : index
    %10 = vector.load %arg5[%c0_9, %c0_10] : memref<32x1xf32, #tpu.memory_space<vmem>>, vector<32x1xf32>
    %11 = vector.broadcast %10 : vector<32x1xf32> to vector<32x128xf32>
    %12 = arith.addf %9, %11 : vector<32x128xf32>
    %cst_11 = arith.constant 0.000000e+00 : f32
    %13 = vector.broadcast %cst_11 : f32 to vector<32x128xf32>
    %14 = arith.maximumf %12, %13 : vector<32x128xf32>
    %c0_12 = arith.constant 0 : index
    %c0_13 = arith.constant 0 : index
    %15 = vector.load %arg6[%c0_12, %c0_13] : memref<1x32xf32, #tpu.memory_space<vmem>>, vector<1x32xf32>
    %cst_14 = arith.constant dense<0.000000e+00> : vector<1x128xf32>
    %16 = tpu.matmul %15, %14, %cst_14 {dimension_numbers = #tpu.dot_dimension_numbers<[1], [0], [0], [1], [0, 0, 1, 1], [], []>} : vector<1x32xf32>, vector<32x128xf32>, vector<1x128xf32> -> vector<1x128xf32>
    %c0_15 = arith.constant 0 : index
    %c0_16 = arith.constant 0 : index
    %17 = vector.load %arg7[%c0_15, %c0_16] : memref<1x1xf32, #tpu.memory_space<vmem>>, vector<1x1xf32>
    %18 = vector.broadcast %17 : vector<1x1xf32> to vector<1x128xf32>
    %19 = arith.addf %16, %18 : vector<1x128xf32>
    %c0_17 = arith.constant 0 : index
    %c0_18 = arith.constant 0 : index
    %20 = vector.load %arg8[%c0_17, %c0_18] : memref<1x128xf32, #tpu.memory_space<vmem>>, vector<1x128xf32>
    tpu.vector_store %arg8[%c0_17, %c0_18], %19 {strides = array<i32>} : memref<1x128xf32, #tpu.memory_space<vmem>>, vector<1x128xf32>,
    return
  }
  func.func @transform_0(%arg0: i32) -> (i32, i32) {
    %c0_i32 = arith.constant 0 : i32
    %c0_i32_0 = arith.constant 0 : i32
    return %c0_i32, %arg0 : i32, i32
  }
  func.func @transform_1(%arg0: i32) -> (i32, i32) {
    %c0_i32 = arith.constant 0 : i32
    %c0_i32_0 = arith.constant 0 : i32
    %c0_i32_1 = arith.constant 0 : i32
    return %c0_i32, %c0_i32_0 : i32, i32
  }
  func.func @transform_2(%arg0: i32) -> (i32, i32) {
    %c0_i32 = arith.constant 0 : i32
    %c0_i32_0 = arith.constant 0 : i32
    %c0_i32_1 = arith.constant 0 : i32
    return %c0_i32, %c0_i32_0 : i32, i32
  }
  func.func @transform_3(%arg0: i32) -> (i32, i32) {
    %c0_i32 = arith.constant 0 : i32
    %c0_i32_0 = arith.constant 0 : i32
    %c0_i32_1 = arith.constant 0 : i32
    return %c0_i32, %c0_i32_0 : i32, i32
  }
  func.func @transform_4(%arg0: i32) -> (i32, i32) {
    %c0_i32 = arith.constant 0 : i32
    %c0_i32_0 = arith.constant 0 : i32
    %c0_i32_1 = arith.constant 0 : i32
    return %c0_i32, %c0_i32_0 : i32, i32
  }
  func.func @transform_5(%arg0: i32) -> (i32, i32) {
    %c0_i32 = arith.constant 0 : i32
    %c0_i32_0 = arith.constant 0 : i32
    %c0_i32_1 = arith.constant 0 : i32
    return %c0_i32, %c0_i32_0 : i32, i32
  }
  func.func @transform_6(%arg0: i32) -> (i32, i32) {
    %c0_i32 = arith.constant 0 : i32
    %c0_i32_0 = arith.constant 0 : i32
    %c0_i32_1 = arith.constant 0 : i32
    return %c0_i32, %c0_i32_0 : i32, i32
  }
  func.func @transform_7(%arg0: i32) -> (i32, i32) {
    %c0_i32 = arith.constant 0 : i32
    %c0_i32_0 = arith.constant 0 : i32
    return %c0_i32, %arg0 : i32, i32
  }
}

</mosaic_0001>

<llo_original>
// kernel: meta_value_network_forward.1
$region0: #{meta_value_network_forward.1}
  #allocation0 [shape = 'u32[]', space=smem, size = 0x4, offset = 0x4, fixed_abs, tag = 'smem constant byte address 0x4 - core index']
  #allocation1 [shape = 'u32[144,128]{1,0:T(1,128)}', space=vmem, size = 0x12000, scoped, tag = 'internal scratch']
  #allocation2 [shape = 'f32[1,1]{1,0:T(1,128)S(1)}', space=vmem, size = 0x200, scoped, tag = 'scoped memory for meta_value_network_forward.1']
  %s0 = inlined_call_operand.vmem [shape: f32[4,128], index: 0, kind: input, shape index: {}]
  %s1 = inlined_call_operand.vmem [shape: f32[32,4], index: 1, kind: input, shape index: {}]
  %s2 = inlined_call_operand.vmem [shape: f32[32,1], index: 2, kind: input, shape index: {}]
  %s3 = inlined_call_operand.vmem [shape: f32[32,32], index: 3, kind: input, shape index: {}]
  %s4 = inlined_call_operand.vmem [shape: f32[32,1], index: 4, kind: input, shape index: {}]
  %s5 = inlined_call_operand.vmem [shape: f32[1,32], index: 5, kind: input, shape index: {}]
  %s6 = inlined_call_operand.<no memory space> [shape: f32[1,1], index: 6, kind: input, shape index: {}]
  %s7 = inlined_call_operand.vmem [shape: f32[1,128], index: 7, kind: output, shape index: {}]
  %s8 = sld [smem:[#allocation0]]
  $region38: #{meta_value_network_forward.1} parent=0
    _
  %s10 = ssub.s32 1, %s8
  %s11 = scalar_select 0, %s10, %s8
  %v12 = vstv %s6
  %13 = vst [vmem:[#allocation2] sm:$0x1] %v12
  // Predicated region
  $region2: #{meta_value_network_forward.1} parent=0 // pred_check
    _
  $region3: #{meta_value_network_forward.1} parent=0 // pred_check_branch
    %15 = sbr.rel (0) target = $region5
  $region4: #{meta_value_network_forward.1} parent=0 // pred_region
    _
  $region5: #{meta_value_network_forward.1} parent=0 // pred_fallthru
    _
  // Predicated region
  $region6: #{meta_value_network_forward.1} parent=0 // pred_check
    _
  $region7: #{meta_value_network_forward.1} parent=0 // pred_check_branch
    %17 = sbr.rel (0) target = $region9
  $region8: #{meta_value_network_forward.1} parent=0 // pred_region
    _
  $region9: #{meta_value_network_forward.1} parent=0 // pred_fallthru
    _
  // Predicated region
  $region10: #{meta_value_network_forward.1} parent=0 // pred_check
    _
  $region11: #{meta_value_network_forward.1} parent=0 // pred_check_branch
    %19 = sbr.rel (0) target = $region13
  $region12: #{meta_value_network_forward.1} parent=0 // pred_region
    _
  $region13: #{meta_value_network_forward.1} parent=0 // pred_fallthru
    _
  // Predicated region
  $region14: #{meta_value_network_forward.1} parent=0 // pred_check
    _
  $region15: #{meta_value_network_forward.1} parent=0 // pred_check_branch
    %21 = sbr.rel (0) target = $region17
  $region16: #{meta_value_network_forward.1} parent=0 // pred_region
    _
  $region17: #{meta_value_network_forward.1} parent=0 // pred_fallthru
    _
  // Predicated region
  $region18: #{meta_value_network_forward.1} parent=0 // pred_check
    _
  $region19: #{meta_value_network_forward.1} parent=0 // pred_check_branch
    %23 = sbr.rel (0) target = $region21
  $region20: #{meta_value_network_forward.1} parent=0 // pred_region
    _
  $region21: #{meta_value_network_forward.1} parent=0 // pred_fallthru
    _
  // Predicated region
  $region22: #{meta_value_network_forward.1} parent=0 // pred_check
    _
  $region23: #{meta_value_network_forward.1} parent=0 // pred_check_branch
    %25 = sbr.rel (0) target = $region25
  $region24: #{meta_value_network_forward.1} parent=0 // pred_region
    _
  $region25: #{meta_value_network_forward.1} parent=0 // pred_fallthru
    _
  // Predicated region
  $region26: #{meta_value_network_forward.1} parent=0 // pred_check
    _
  $region27: #{meta_value_network_forward.1} parent=0 // pred_check_branch
    %27 = sbr.rel (0) target = $region29
  $region28: #{meta_value_network_forward.1} parent=0 // pred_region
    _
  $region29: #{meta_value_network_forward.1} parent=0 // pred_fallthru
    _
  %v28 = vld [vmem:[%s1] sm:$0xff]
  %v29 = vld [vmem:[%s1 + $0x8] sm:$0xff]
  %v30 = vld [vmem:[%s1 + $0x10] sm:$0xff]
  %v31 = vld [vmem:[%s1 + $0x18] sm:$0xff]
  %v32 = vld [vmem:[%s0] sm:$0xf]
  %v33 = vld [vmem:[%s2] sm:$0xff]
  %v34 = vld [vmem:[%s2 + $0x8] sm:$0xff]
  %v35 = vld [vmem:[%s2 + $0x10] sm:$0xff]
  %v36 = vld [vmem:[%s2 + $0x18] sm:$0xff]
  %38 = vset.pattern.permute.xlu0 0
  %39 = vperm.xlu0 %38, %v33
  %v40 = vpop.permute.xlu0 %39
  %43 = vset.pattern.permute.xlu0 0
  %44 = vperm.xlu0 %43, %v34
  %v45 = vpop.permute.xlu0 %44
  %48 = vset.pattern.permute.xlu0 0
  %49 = vperm.xlu0 %48, %v35
  %v50 = vpop.permute.xlu0 %49
  %53 = vset.pattern.permute.xlu0 0
  %54 = vperm.xlu0 %53, %v36
  %v55 = vpop.permute.xlu0 %54
  %vm57 = vcmask 31744
  %v59 = vsel %vm57, %v28, 0
  %v62 = vsel %vm57, %v29, 0
  %v65 = vsel %vm57, %v30, 0
  %v68 = vsel %vm57, %v31, 0
  %vm70 = vcmask 1043456
  %v72 = vsel %vm70, %v32, 0
  %74 = vmatprep.subr.mxu0 0.0
  %75 = vmatpush1.msra.mxu0 %v72
  %76 = vmatprep.subr.mxu0 0.0
  %77 = vmatpush1.msra.mxu0 0.0
  %78 = vmatprep.subr.mxu0 0.0
  %79 = vmatpush1.msra.mxu0 0.0
  %80 = vmatprep.subr.mxu0 0.0
  %81 = vmatpush1.msra.mxu0 0.0
  %82 = vmatprep.subr.mxu0 0.0
  %83 = vmatpush1.msra.mxu0 0.0
  %84 = vmatprep.subr.mxu0 0.0
  %85 = vmatpush1.msra.mxu0 0.0
  %86 = vmatprep.subr.mxu0 0.0
  %87 = vmatpush1.msra.mxu0 0.0
  %88 = vmatprep.subr.mxu0 0.0
  %89 = vmatpush1.msra.mxu0 0.0
  %90 = vmatprep.subr.mxu0 0.0
  %91 = vmatpush1.msra.mxu0 0.0
  %92 = vmatprep.subr.mxu0 0.0
  %93 = vmatpush1.msra.mxu0 0.0
  %94 = vmatprep.subr.mxu0 0.0
  %95 = vmatpush1.msra.mxu0 0.0
  %96 = vmatprep.subr.mxu0 0.0
  %97 = vmatpush1.msra.mxu0 0.0
  %98 = vmatprep.subr.mxu0 0.0
  %99 = vmatpush1.msra.mxu0 0.0
  %100 = vmatprep.subr.mxu0 0.0
  %101 = vmatpush1.msra.mxu0 0.0
  %102 = vmatprep.subr.mxu0 0.0
  %103 = vmatpush1.msra.mxu0 0.0
  %104 = vmatprep.subr.mxu0 0.0
  %105 = vmatpush1.msra.mxu0 0.0
  %106 = vmatprep.subr.mxu0 0.0
  %107 = vmatpush1.msra.mxu0 0.0
  %108 = vmatprep.subr.mxu0 0.0
  %109 = vmatpush1.msra.mxu0 0.0
  %110 = vmatprep.subr.mxu0 0.0
  %111 = vmatpush1.msra.mxu0 0.0
  %112 = vmatprep.subr.mxu0 0.0
  %113 = vmatpush1.msra.mxu0 0.0
  %114 = vmatprep.subr.mxu0 0.0
  %115 = vmatpush1.msra.mxu0 0.0
  %116 = vmatprep.subr.mxu0 0.0
  %117 = vmatpush1.msra.mxu0 0.0
  %118 = vmatprep.subr.mxu0 0.0
  %119 = vmatpush1.msra.mxu0 0.0
  %120 = vmatprep.subr.mxu0 0.0
  %121 = vmatpush1.msra.mxu0 0.0
  %122 = vmatprep.subr.mxu0 0.0
  %123 = vmatpush1.msra.mxu0 0.0
  %124 = vmatprep.subr.mxu0 0.0
  %125 = vmatpush1.msra.mxu0 0.0
  %126 = vmatprep.subr.mxu0 0.0
  %127 = vmatpush1.msra.mxu0 0.0
  %128 = vmatprep.subr.mxu0 0.0
  %129 = vmatpush1.msra.mxu0 0.0
  %130 = vmatprep.subr.mxu0 0.0
  %131 = vmatpush1.msra.mxu0 0.0
  %132 = vmatprep.subr.mxu0 0.0
  %133 = vmatpush1.msra.mxu0 0.0
  %134 = vmatprep.subr.mxu0 0.0
  %135 = vmatpush1.msra.mxu0 0.0
  %136 = vmatprep.subr.mxu0 0.0
  %137 = vmatpush1.msra.mxu0 0.0
  %138 = vmatprep.mubr.f32.mxu0 0.0
  %139 = vmatmul.mubr.f32.gmra.mrb[0].mxu0 %v59
  %v140 = vpop.f32.mrb[0].mxu0
  %v141 = vadd.f32 %v40, %v140
  %v142 = vpop.f32.mrb[0].mxu0
  %143 = vmatprep.mubr.f32.mxu0 0.0
  %144 = vmatmul.mubr.f32.gmra.mrb[0].mxu0 %v62
  %v145 = vpop.f32.mrb[0].mxu0
  %v146 = vadd.f32 %v45, %v145
  %v147 = vpop.f32.mrb[0].mxu0
  %148 = vmatprep.mubr.f32.mxu0 0.0
  %149 = vmatmul.mubr.f32.gmra.mrb[0].mxu0 %v65
  %v150 = vpop.f32.mrb[0].mxu0
  %v151 = vadd.f32 %v50, %v150
  %v152 = vpop.f32.mrb[0].mxu0
  %153 = vmatprep.mubr.f32.mxu0 0.0
  %154 = vmatmul.mubr.f32.gmra.mrb[0].mxu0 %v68
  %v155 = vpop.f32.mrb[0].mxu0
  %v156 = vadd.f32 %v55, %v155
  %v157 = vpop.f32.mrb[0].mxu0
  %158 = vdwg.mxu0
  %v159 = vmax.f32 %v141, 0.0
  %v160 = vmax.f32 %v146, 0.0
  %v161 = vmax.f32 %v151, 0.0
  %v162 = vmax.f32 %v156, 0.0
  %v163 = vld [vmem:[%s3] sm:$0xff]
  %v164 = vld [vmem:[%s3 + $0x8] sm:$0xff]
  %v165 = vld [vmem:[%s3 + $0x10] sm:$0xff]
  %v166 = vld [vmem:[%s3 + $0x18] sm:$0xff]
  %v167 = vld [vmem:[%s4] sm:$0xff]
  %v168 = vld [vmem:[%s4 + $0x8] sm:$0xff]
  %v169 = vld [vmem:[%s4 + $0x10] sm:$0xff]
  %v170 = vld [vmem:[%s4 + $0x18] sm:$0xff]
  %172 = vset.pattern.permute.xlu0 0
  %173 = vperm.xlu0 %172, %v167
  %v174 = vpop.permute.xlu0 %173
  %177 = vset.pattern.permute.xlu0 0
  %178 = vperm.xlu0 %177, %v168
  %v179 = vpop.permute.xlu0 %178
  %182 = vset.pattern.permute.xlu0 0
  %183 = vperm.xlu0 %182, %v169
  %v184 = vpop.permute.xlu0 %183
  %187 = vset.pattern.permute.xlu0 0
  %188 = vperm.xlu0 %187, %v170
  %v189 = vpop.permute.xlu0 %188
  %vm191 = vcmask 261120
  %v193 = vsel %vm191, %v163, 0
  %v196 = vsel %vm191, %v164, 0
  %v199 = vsel %vm191, %v165, 0
  %v202 = vsel %vm191, %v166, 0
  %204 = vmatprep.subr.mxu0 0.0
  %205 = vmatpush1.msra.mxu0 %v159
  %206 = vmatprep.subr.mxu0 0.0
  %207 = vmatpush1.msra.mxu0 %v160
  %208 = vmatprep.subr.mxu0 0.0
  %209 = vmatpush1.msra.mxu0 %v161
  %210 = vmatprep.subr.mxu0 0.0
  %211 = vmatpush1.msra.mxu0 %v162
  %212 = vmatprep.subr.mxu0 0.0
  %213 = vmatpush1.msra.mxu0 0.0
  %214 = vmatprep.subr.mxu0 0.0
  %215 = vmatpush1.msra.mxu0 0.0
  %216 = vmatprep.subr.mxu0 0.0
  %217 = vmatpush1.msra.mxu0 0.0
  %218 = vmatprep.subr.mxu0 0.0
  %219 = vmatpush1.msra.mxu0 0.0
  %220 = vmatprep.subr.mxu0 0.0
  %221 = vmatpush1.msra.mxu0 0.0
  %222 = vmatprep.subr.mxu0 0.0
  %223 = vmatpush1.msra.mxu0 0.0
  %224 = vmatprep.subr.mxu0 0.0
  %225 = vmatpush1.msra.mxu0 0.0
  %226 = vmatprep.subr.mxu0 0.0
  %227 = vmatpush1.msra.mxu0 0.0
  %228 = vmatprep.subr.mxu0 0.0
  %229 = vmatpush1.msra.mxu0 0.0
  %230 = vmatprep.subr.mxu0 0.0
  %231 = vmatpush1.msra.mxu0 0.0
  %232 = vmatprep.subr.mxu0 0.0
  %233 = vmatpush1.msra.mxu0 0.0
  %234 = vmatprep.subr.mxu0 0.0
  %235 = vmatpush1.msra.mxu0 0.0
  %236 = vmatprep.subr.mxu0 0.0
  %237 = vmatpush1.msra.mxu0 0.0
  %238 = vmatprep.subr.mxu0 0.0
  %239 = vmatpush1.msra.mxu0 0.0
  %240 = vmatprep.subr.mxu0 0.0
  %241 = vmatpush1.msra.mxu0 0.0
  %242 = vmatprep.subr.mxu0 0.0
  %243 = vmatpush1.msra.mxu0 0.0
  %244 = vmatprep.subr.mxu0 0.0
  %245 = vmatpush1.msra.mxu0 0.0
  %246 = vmatprep.subr.mxu0 0.0
  %247 = vmatpush1.msra.mxu0 0.0
  %248 = vmatprep.subr.mxu0 0.0
  %249 = vmatpush1.msra.mxu0 0.0
  %250 = vmatprep.subr.mxu0 0.0
  %251 = vmatpush1.msra.mxu0 0.0
  %252 = vmatprep.subr.mxu0 0.0
  %253 = vmatpush1.msra.mxu0 0.0
  %254 = vmatprep.subr.mxu0 0.0
  %255 = vmatpush1.msra.mxu0 0.0
  %256 = vmatprep.subr.mxu0 0.0
  %257 = vmatpush1.msra.mxu0 0.0
  %258 = vmatprep.subr.mxu0 0.0
  %259 = vmatpush1.msra.mxu0 0.0
  %260 = vmatprep.subr.mxu0 0.0
  %261 = vmatpush1.msra.mxu0 0.0
  %262 = vmatprep.subr.mxu0 0.0
  %263 = vmatpush1.msra.mxu0 0.0
  %264 = vmatprep.subr.mxu0 0.0
  %265 = vmatpush1.msra.mxu0 0.0
  %266 = vmatprep.subr.mxu0 0.0
  %267 = vmatpush1.msra.mxu0 0.0
  %268 = vmatprep.mubr.f32.mxu0 0.0
  %269 = vmatmul.mubr.f32.gmra.mrb[0].mxu0 %v193
  %v270 = vpop.f32.mrb[0].mxu0
  %v271 = vadd.f32 %v174, %v270
  %v272 = vpop.f32.mrb[0].mxu0
  %273 = vmatprep.mubr.f32.mxu0 0.0
  %274 = vmatmul.mubr.f32.gmra.mrb[0].mxu0 %v196
  %v275 = vpop.f32.mrb[0].mxu0
  %v276 = vadd.f32 %v179, %v275
  %v277 = vpop.f32.mrb[0].mxu0
  %278 = vmatprep.mubr.f32.mxu0 0.0
  %279 = vmatmul.mubr.f32.gmra.mrb[0].mxu0 %v199
  %v280 = vpop.f32.mrb[0].mxu0
  %v281 = vadd.f32 %v184, %v280
  %v282 = vpop.f32.mrb[0].mxu0
  %283 = vmatprep.mubr.f32.mxu0 0.0
  %284 = vmatmul.mubr.f32.gmra.mrb[0].mxu0 %v202
  %v285 = vpop.f32.mrb[0].mxu0
  %v286 = vadd.f32 %v189, %v285
  %v287 = vpop.f32.mrb[0].mxu0
  %288 = vdwg.mxu0
  %v289 = vmax.f32 %v271, 0.0
  %v290 = vmax.f32 %v276, 0.0
  %v291 = vmax.f32 %v281, 0.0
  %v292 = vmax.f32 %v286, 0.0
  %v293 = vld [vmem:[%s5] sm:$0x1]
  %v294 = vld [vmem:[#allocation2] sm:$0x1]
  %296 = vset.pattern.permute.xlu0 0
  %297 = vperm.xlu0 %296, %v294
  %v298 = vpop.permute.xlu0 %297
  %v300 = vlaneseq
  %v301 = vshrl.u32 %v300, 7
  %v302 = vsub.s32 0, %v301
  %v303 = vrot.slane %v298, %v302
  %v305 = vsel %vm191, %v293, 0
  %307 = vmatprep.subr.mxu0 0.0
  %308 = vmatpush1.msra.mxu0 %v289
  %309 = vmatprep.subr.mxu0 0.0
  %310 = vmatpush1.msra.mxu0 %v290
  %311 = vmatprep.subr.mxu0 0.0
  %312 = vmatpush1.msra.mxu0 %v291
  %313 = vmatprep.subr.mxu0 0.0
  %314 = vmatpush1.msra.mxu0 %v292
  %315 = vmatprep.subr.mxu0 0.0
  %316 = vmatpush1.msra.mxu0 0.0
  %317 = vmatprep.subr.mxu0 0.0
  %318 = vmatpush1.msra.mxu0 0.0
  %319 = vmatprep.subr.mxu0 0.0
  %320 = vmatpush1.msra.mxu0 0.0
  %321 = vmatprep.subr.mxu0 0.0
  %322 = vmatpush1.msra.mxu0 0.0
  %323 = vmatprep.subr.mxu0 0.0
  %324 = vmatpush1.msra.mxu0 0.0
  %325 = vmatprep.subr.mxu0 0.0
  %326 = vmatpush1.msra.mxu0 0.0
  %327 = vmatprep.subr.mxu0 0.0
  %328 = vmatpush1.msra.mxu0 0.0
  %329 = vmatprep.subr.mxu0 0.0
  %330 = vmatpush1.msra.mxu0 0.0
  %331 = vmatprep.subr.mxu0 0.0
  %332 = vmatpush1.msra.mxu0 0.0
  %333 = vmatprep.subr.mxu0 0.0
  %334 = vmatpush1.msra.mxu0 0.0
  %335 = vmatprep.subr.mxu0 0.0
  %336 = vmatpush1.msra.mxu0 0.0
  %337 = vmatprep.subr.mxu0 0.0
  %338 = vmatpush1.msra.mxu0 0.0
  %339 = vmatprep.subr.mxu0 0.0
  %340 = vmatpush1.msra.mxu0 0.0
  %341 = vmatprep.subr.mxu0 0.0
  %342 = vmatpush1.msra.mxu0 0.0
  %343 = vmatprep.subr.mxu0 0.0
  %344 = vmatpush1.msra.mxu0 0.0
  %345 = vmatprep.subr.mxu0 0.0
  %346 = vmatpush1.msra.mxu0 0.0
  %347 = vmatprep.subr.mxu0 0.0
  %348 = vmatpush1.msra.mxu0 0.0
  %349 = vmatprep.subr.mxu0 0.0
  %350 = vmatpush1.msra.mxu0 0.0
  %351 = vmatprep.subr.mxu0 0.0
  %352 = vmatpush1.msra.mxu0 0.0
  %353 = vmatprep.subr.mxu0 0.0
  %354 = vmatpush1.msra.mxu0 0.0
  %355 = vmatprep.subr.mxu0 0.0
  %356 = vmatpush1.msra.mxu0 0.0
  %357 = vmatprep.subr.mxu0 0.0
  %358 = vmatpush1.msra.mxu0 0.0
  %359 = vmatprep.subr.mxu0 0.0
  %360 = vmatpush1.msra.mxu0 0.0
  %361 = vmatprep.subr.mxu0 0.0
  %362 = vmatpush1.msra.mxu0 0.0
  %363 = vmatprep.subr.mxu0 0.0
  %364 = vmatpush1.msra.mxu0 0.0
  %365 = vmatprep.subr.mxu0 0.0
  %366 = vmatpush1.msra.mxu0 0.0
  %367 = vmatprep.subr.mxu0 0.0
  %368 = vmatpush1.msra.mxu0 0.0
  %369 = vmatprep.subr.mxu0 0.0
  %370 = vmatpush1.msra.mxu0 0.0
  %371 = vmatprep.mubr.f32.mxu0 0.0
  %372 = vmatmul.mubr.f32.gmra.mrb[0].mxu0 %v305
  %v373 = vpop.f32.mrb[0].mxu0
  %v374 = vadd.f32 %v303, %v373
  %v375 = vpop.f32.mrb[0].mxu0
  %376 = vdwg.mxu0
  %377 = vst [vmem:[%s7] sm:$0x1] %v374
  // Predicated region
  $region30: #{meta_value_network_forward.1} parent=0 // pred_check
    _
  $region31: #{meta_value_network_forward.1} parent=0 // pred_check_branch
    %379 = sbr.rel (0) target = $region33
  $region32: #{meta_value_network_forward.1} parent=0 // pred_region
    _
  $region33: #{meta_value_network_forward.1} parent=0 // pred_fallthru
    _
  // Predicated region
  $region34: #{meta_value_network_forward.1} parent=0 // pred_check
    _
  $region35: #{meta_value_network_forward.1} parent=0 // pred_check_branch
    %381 = sbr.rel (0) target = $region37
  $region36: #{meta_value_network_forward.1} parent=0 // pred_region
    _
  $region37: #{meta_value_network_forward.1} parent=0 // pred_fallthru
    _

</llo_original>
